<compile_context>
chip_gen: v5e
topology: v5e:2x2
jax: 0.10.0
libtpu: 0.0.40
codegen_flags: <defaults>
</compile_context>

<pallas_src>
import jax
import jax.numpy as jnp
from jax.experimental import pallas as pl
from jax.experimental.pallas import tpu as pltpu


K_IN = 784     # input features
H1 = 128
H2 = 256
N_OUT = 10     # logits


def mnist_mlp_kernel(x_ref, w1_ref, b1_ref, w2_ref, b2_ref, w3_ref, b3_ref,
                     o_ref):
    # x arrives as f32; cast to the weight dtype (bf16) in VMEM — no extra
    # HBM pass for the cast.
    x = x_ref[...].astype(w1_ref.dtype)
    # Layer 1: (TB, 784) @ (784, 128), f32 accumulation on the MXU, + bias, ReLU.
    h1 = jnp.dot(x, w1_ref[...], preferred_element_type=jnp.float32)
    h1 = jnp.maximum(h1 + b1_ref[...], 0.0).astype(w2_ref.dtype)
    # Layer 2: (TB, 128) @ (128, 256)
    h2 = jnp.dot(h1, w2_ref[...], preferred_element_type=jnp.float32)
    h2 = jnp.maximum(h2 + b2_ref[...], 0.0).astype(w3_ref.dtype)
    # Output layer: (TB, 256) @ (256, 10); narrow f32 store (masked vst is
    # hidden under the matmuls).
    o_ref[...] = (jnp.dot(h2, w3_ref[...], preferred_element_type=jnp.float32)
                  + b3_ref[...]).astype(o_ref.dtype)


def _round_up(n, m):
    return (n + m - 1) // m * m


def _vmem_limit_bytes(tb):
    """Per-step VMEM estimate + headroom (capped for v7x's 64 MiB physical)."""
    x_tiles = 2 * tb * K_IN * 4                     # double-buffered f32 x tile
    out_tiles = 2 * tb * N_OUT * 4                  # double-buffered out tile
    weights = (K_IN * H1 + H1 * H2 + H2 * N_OUT) * 2 \
        + (H1 + H2 + N_OUT) * 4                     # resident bf16 W + f32 b
    # internal temporaries: bf16 x copy, h1 (f32 + bf16), h2 (f32 + bf16)
    scratch = tb * (K_IN * 2 + H1 * 6 + H2 * 6)
    est = x_tiles + out_tiles + weights + scratch
    limit = int(est * 1.5) + (4 << 20)
    return max(min(limit, 64 << 20), 32 << 20)


def mnist_nn_forward(x, w1, b1, w2, b2, w3, b3, *,
                     block_b=2048, compute_dtype=jnp.bfloat16):
    """x: [B, 784] float32 -> logits [B, 10] float32.

    w1:[784,128] b1:[128] or [1,128]   w2:[128,256] b2:[256] or [1,256]
    w3:[256,10]  b3:[10]  or [1,10]
    block_b: batch tile; sweep {1024, 2048, 4096} (multiple of 8).
    """
    B = x.shape[0]
    x = x.astype(jnp.float32)

    # One-time operand prep: weights -> bf16 (half the resident bytes), biases
    # stay f32 and are reshaped to (1, N) rows.
    w1c = w1.astype(compute_dtype)
    w2c = w2.astype(compute_dtype)
    w3c = w3.astype(compute_dtype)
    b1c = b1.astype(jnp.float32).reshape(1, H1)
    b2c = b2.astype(jnp.float32).reshape(1, H2)
    b3c = b3.astype(jnp.float32).reshape(1, N_OUT)

    # Batch: pad only to a multiple of 8 (sublane); never to a full tile.
    b8 = _round_up(max(B, 1), 8)
    xp = x if b8 == B else jnp.pad(x, ((0, b8 - B), (0, 0)))
    tb = min(_round_up(block_b, 8), b8)
    grid = (pl.cdiv(b8, tb),)   # partial edge block handled by Pallas

    def resident(shape):
        # Weights/biases: same block every grid step -> stay VMEM-resident.
        return pl.BlockSpec(shape, lambda i: (0,) * len(shape))

    flops = 2 * b8 * (K_IN * H1 + H1 * H2 + H2 * N_OUT)
    bytes_accessed = (
        xp.size * 4
        + (w1c.size + w2c.size + w3c.size) * 2
        + (b1c.size + b2c.size + b3c.size) * 4
        + b8 * N_OUT * 4)

    out = pl.pallas_call(
        mnist_mlp_kernel,
        out_shape=jax.ShapeDtypeStruct((b8, N_OUT), jnp.float32),
        grid=grid,
        in_specs=[
            pl.BlockSpec((tb, K_IN), lambda i: (i, 0)),   # x tile (pipelined, f32)
            resident((K_IN, H1)),                         # w1
            resident((1, H1)),                            # b1
            resident((H1, H2)),                           # w2
            resident((1, H2)),                            # b2
            resident((H2, N_OUT)),                        # w3
            resident((1, N_OUT)),                         # b3
        ],
        out_specs=pl.BlockSpec((tb, N_OUT), lambda i: (i, 0)),
        compiler_params=pltpu.CompilerParams(
            dimension_semantics=("parallel",),
            vmem_limit_bytes=_vmem_limit_bytes(tb),
        ),
        cost_estimate=pl.CostEstimate(
            flops=flops, transcendentals=0, bytes_accessed=bytes_accessed),
    )(xp, w1c, b1c, w2c, b2c, w3c, b3c)

    return out if b8 == B else out[:B]


def init_params(key):
    """Deterministic init mimicking nn.Linear default (U(-1/sqrt(fan_in), ...))."""
    ks = jax.random.split(key, 6)

    def linear(kw, kb, fan_in, fan_out):
        bound = 1.0 / jnp.sqrt(fan_in)
        w = jax.random.uniform(kw, (fan_in, fan_out), jnp.float32, -bound, bound)
        b = jax.random.uniform(kb, (1, fan_out), jnp.float32, -bound, bound)
        return w, b

    w1, b1 = linear(ks[0], ks[1], K_IN, H1)
    w2, b2 = linear(ks[2], ks[3], H1, H2)
    w3, b3 = linear(ks[4], ks[5], H2, N_OUT)
    return w1, b1, w2, b2, w3, b3


if __name__ == "__main__":
    key = jax.random.PRNGKey(0)
    k_x, k_p = jax.random.split(key)

    B = 8
    x = jax.random.normal(k_x, (B, K_IN), jnp.float32)
    w1, b1, w2, b2, w3, b3 = init_params(k_p)

    out = mnist_nn_forward(x, w1, b1, w2, b2, w3, b3)
    out = jax.block_until_ready(out)
    assert out.shape == (B, N_OUT)
    assert out.dtype == jnp.float32

    # Reference in plain JAX with the same mixed-precision policy
    # (bf16 matmul inputs, f32 accumulation) -- same math as the PyTorch forward.
    cd = jnp.bfloat16
    h = jnp.dot(x.astype(cd), w1.astype(cd),
                preferred_element_type=jnp.float32) + b1
    h = jnp.maximum(h, 0.0)
    h = jnp.dot(h.astype(cd), w2.astype(cd),
                preferred_element_type=jnp.float32) + b2
    h = jnp.maximum(h, 0.0)
    ref = jnp.dot(h.astype(cd), w3.astype(cd),
                  preferred_element_type=jnp.float32) + b3

    assert jnp.allclose(out, ref, atol=5e-3, rtol=5e-3), (
        float(jnp.max(jnp.abs(out - ref))))

    print("KERNEL_OK")
</pallas_src>

<mosaic_0001>
module attributes {stable_mosaic.version = 11 : i64} {
  func.func @mnist_mlp_kernel(%arg0: i32, %arg1: memref<8x784xf32, #tpu.memory_space<vmem>>, %arg2: memref<784x128xbf16, #tpu.memory_space<vmem>>, %arg3: memref<1x128xf32, #tpu.memory_space<vmem>>, %arg4: memref<128x256xbf16, #tpu.memory_space<vmem>>, %arg5: memref<1x256xf32, #tpu.memory_space<vmem>>, %arg6: memref<256x10xbf16, #tpu.memory_space<vmem>>, %arg7: memref<1x10xf32, #tpu.memory_space<vmem>>, %arg8: memref<8x10xf32, #tpu.memory_space<vmem>>) attributes {dimension_semantics = [#tpu.dimension_semantics<parallel>], iteration_bounds = array<i64: 1>, scalar_prefetch = 0 : i64, scratch_operands = 0 : i64, tpu.core_type = #tpu.core_type<tc>, window_params = [{transform_indices = @transform_0, window_bounds = array<i64: 8, 784>}, {pipeline_mode = #tpu.pipeline_mode<synchronous>, transform_indices = @transform_1, window_bounds = array<i64: 784, 128>}, {pipeline_mode = #tpu.pipeline_mode<synchronous>, transform_indices = @transform_2, window_bounds = array<i64: 1, 128>}, {pipeline_mode = #tpu.pipeline_mode<synchronous>, transform_indices = @transform_3, window_bounds = array<i64: 128, 256>}, {pipeline_mode = #tpu.pipeline_mode<synchronous>, transform_indices = @transform_4, window_bounds = array<i64: 1, 256>}, {pipeline_mode = #tpu.pipeline_mode<synchronous>, transform_indices = @transform_5, window_bounds = array<i64: 256, 10>}, {pipeline_mode = #tpu.pipeline_mode<synchronous>, transform_indices = @transform_6, window_bounds = array<i64: 1, 10>}, {transform_indices = @transform_7, window_bounds = array<i64: 8, 10>}]} {
    %c0 = arith.constant 0 : index
    %c0_0 = arith.constant 0 : index
    %0 = vector.load %arg1[%c0, %c0_0] : memref<8x784xf32, #tpu.memory_space<vmem>>, vector<8x784xf32>
    %1 = arith.truncf %0 : vector<8x784xf32> to vector<8x784xbf16>
    %c0_1 = arith.constant 0 : index
    %c0_2 = arith.constant 0 : index
    %2 = vector.load %arg2[%c0_1, %c0_2] : memref<784x128xbf16, #tpu.memory_space<vmem>>, vector<784x128xbf16>
    %cst = arith.constant dense<0.000000e+00> : vector<8x128xf32>
    %3 = tpu.matmul %1, %2, %cst {dimension_numbers = #tpu.dot_dimension_numbers<[1], [0], [0], [1], [0, 0, 1, 1], [], []>} : vector<8x784xbf16>, vector<784x128xbf16>, vector<8x128xf32> -> vector<8x128xf32>
    %c0_3 = arith.constant 0 : index
    %c0_4 = arith.constant 0 : index
    %4 = vector.load %arg3[%c0_3, %c0_4] : memref<1x128xf32, #tpu.memory_space<vmem>>, vector<1x128xf32>
    %5 = vector.broadcast %4 : vector<1x128xf32> to vector<8x128xf32>
    %6 = arith.addf %3, %5 : vector<8x128xf32>
    %cst_5 = arith.constant 0.000000e+00 : f32
    %7 = vector.broadcast %cst_5 : f32 to vector<8x128xf32>
    %8 = arith.maximumf %6, %7 : vector<8x128xf32>
    %9 = arith.truncf %8 : vector<8x128xf32> to vector<8x128xbf16>
    %c0_6 = arith.constant 0 : index
    %c0_7 = arith.constant 0 : index
    %10 = vector.load %arg4[%c0_6, %c0_7] : memref<128x256xbf16, #tpu.memory_space<vmem>>, vector<128x256xbf16>
    %cst_8 = arith.constant dense<0.000000e+00> : vector<8x256xf32>
    %11 = tpu.matmul %9, %10, %cst_8 {dimension_numbers = #tpu.dot_dimension_numbers<[1], [0], [0], [1], [0, 0, 1, 1], [], []>} : vector<8x128xbf16>, vector<128x256xbf16>, vector<8x256xf32> -> vector<8x256xf32>
    %c0_9 = arith.constant 0 : index
    %c0_10 = arith.constant 0 : index
    %12 = vector.load %arg5[%c0_9, %c0_10] : memref<1x256xf32, #tpu.memory_space<vmem>>, vector<1x256xf32>
    %13 = vector.broadcast %12 : vector<1x256xf32> to vector<8x256xf32>
    %14 = arith.addf %11, %13 : vector<8x256xf32>
    %cst_11 = arith.constant 0.000000e+00 : f32
    %15 = vector.broadcast %cst_11 : f32 to vector<8x256xf32>
    %16 = arith.maximumf %14, %15 : vector<8x256xf32>
    %17 = arith.truncf %16 : vector<8x256xf32> to vector<8x256xbf16>
    %c0_12 = arith.constant 0 : index
    %c0_13 = arith.constant 0 : index
    %18 = vector.load %arg6[%c0_12, %c0_13] : memref<256x10xbf16, #tpu.memory_space<vmem>>, vector<256x10xbf16>
    %cst_14 = arith.constant dense<0.000000e+00> : vector<8x10xf32>
    %19 = tpu.matmul %17, %18, %cst_14 {dimension_numbers = #tpu.dot_dimension_numbers<[1], [0], [0], [1], [0, 0, 1, 1], [], []>} : vector<8x256xbf16>, vector<256x10xbf16>, vector<8x10xf32> -> vector<8x10xf32>
    %c0_15 = arith.constant 0 : index
    %c0_16 = arith.constant 0 : index
    %20 = vector.load %arg7[%c0_15, %c0_16] : memref<1x10xf32, #tpu.memory_space<vmem>>, vector<1x10xf32>
    %21 = vector.broadcast %20 : vector<1x10xf32> to vector<8x10xf32>
    %22 = arith.addf %19, %21 : vector<8x10xf32>
    %c0_17 = arith.constant 0 : index
    %c0_18 = arith.constant 0 : index
    %23 = vector.load %arg8[%c0_17, %c0_18] : memref<8x10xf32, #tpu.memory_space<vmem>>, vector<8x10xf32>
    tpu.vector_store %arg8[%c0_17, %c0_18], %22 {strides = array<i32>} : memref<8x10xf32, #tpu.memory_space<vmem>>, vector<8x10xf32>,
    return
  }
  func.func @transform_0(%arg0: i32) -> (i32, i32) {
    %c0_i32 = arith.constant 0 : i32
    %c0_i32_0 = arith.constant 0 : i32
    return %arg0, %c0_i32 : i32, i32
  }
  func.func @transform_1(%arg0: i32) -> (i32, i32) {
    %c0_i32 = arith.constant 0 : i32
    %c0_i32_0 = arith.constant 0 : i32
    %c0_i32_1 = arith.constant 0 : i32
    return %c0_i32, %c0_i32_0 : i32, i32
  }
  func.func @transform_2(%arg0: i32) -> (i32, i32) {
    %c0_i32 = arith.constant 0 : i32
    %c0_i32_0 = arith.constant 0 : i32
    %c0_i32_1 = arith.constant 0 : i32
    return %c0_i32, %c0_i32_0 : i32, i32
  }
  func.func @transform_3(%arg0: i32) -> (i32, i32) {
    %c0_i32 = arith.constant 0 : i32
    %c0_i32_0 = arith.constant 0 : i32
    %c0_i32_1 = arith.constant 0 : i32
    return %c0_i32, %c0_i32_0 : i32, i32
  }
  func.func @transform_4(%arg0: i32) -> (i32, i32) {
    %c0_i32 = arith.constant 0 : i32
    %c0_i32_0 = arith.constant 0 : i32
    %c0_i32_1 = arith.constant 0 : i32
    return %c0_i32, %c0_i32_0 : i32, i32
  }
  func.func @transform_5(%arg0: i32) -> (i32, i32) {
    %c0_i32 = arith.constant 0 : i32
    %c0_i32_0 = arith.constant 0 : i32
    %c0_i32_1 = arith.constant 0 : i32
    return %c0_i32, %c0_i32_0 : i32, i32
  }
  func.func @transform_6(%arg0: i32) -> (i32, i32) {
    %c0_i32 = arith.constant 0 : i32
    %c0_i32_0 = arith.constant 0 : i32
    %c0_i32_1 = arith.constant 0 : i32
    return %c0_i32, %c0_i32_0 : i32, i32
  }
  func.func @transform_7(%arg0: i32) -> (i32, i32) {
    %c0_i32 = arith.constant 0 : i32
    %c0_i32_0 = arith.constant 0 : i32
    return %arg0, %c0_i32 : i32, i32
  }
}

</mosaic_0001>

<llo_original>
// kernel: tpu_custom_call.1
$region0: #{tpu_custom_call.1}
  #allocation0 [shape = 'u32[]', space=smem, size = 0x4, offset = 0x4, fixed_abs, tag = 'smem constant byte address 0x4 - core index']
  #allocation1 [shape = 'u32[72,128]{1,0:T(1,128)}', space=vmem, size = 0x9000, scoped, tag = 'internal scratch']
  %s0 = inlined_call_operand.hbm [shape: f32[8,784], index: 0, kind: input, shape index: {}]
  %s1 = inlined_call_operand.hbm [shape: bf16[784,128], index: 1, kind: input, shape index: {}]
  %s2 = inlined_call_operand.vmem [shape: f32[1,128], index: 2, kind: input, shape index: {}]
  %s3 = inlined_call_operand.vmem [shape: bf16[128,256], index: 3, kind: input, shape index: {}]
  %s4 = inlined_call_operand.vmem [shape: f32[1,256], index: 4, kind: input, shape index: {}]
  %s5 = inlined_call_operand.vmem [shape: bf16[256,10], index: 5, kind: input, shape index: {}]
  %s6 = inlined_call_operand.vmem [shape: f32[1,10], index: 6, kind: input, shape index: {}]
  %s7 = inlined_call_operand.hbm [shape: f32[8,10], index: 7, kind: output, shape index: {}]
  %s8 = sld [smem:[#allocation0]]
  $region46: #{tpu_custom_call.1} parent=0
    _
  %s10 = ssub.s32 1, %s8
  %s11 = scalar_select 0, %s10, %s8
  $region1: #{tpu_custom_call.1} parent=0
    #allocation2 [shape = 'u8[28672]{0}', space=vmem, size = 0x7000, scoped, tag = 'input window, operand 0, single buffered']
    #allocation3 [shape = 's32[1]{0}', space=sflag, size = 0x4, scoped, tag = 'scoped memory for tpu_custom_call.1']
    #allocation4 [shape = 's32[1]{0}', space=sflag, size = 0x4, scoped, tag = 'scoped memory for tpu_custom_call.1']
    #allocation5 [shape = 'u8[200704]{0}', space=vmem, size = 0x31000, scoped, tag = 'input window, operand 1, single buffered']
    #allocation6 [shape = 's32[1]{0}', space=sflag, size = 0x4, scoped, tag = 'scoped memory for tpu_custom_call.1']
    #allocation7 [shape = 'u8[4096]{0}', space=vmem, size = 0x1000, scoped, tag = 'output window, operand 0, single buffered']
    %12 = vsyncpa [#allocation3], 0
    %13 = vsyncpa [#allocation6], 0
    %14 = vsyncpa [#allocation4], 0
    // Predicated region
    $region2: #{tpu_custom_call.1} parent=1 // pred_check
      _
    $region3: #{tpu_custom_call.1} parent=1 // pred_check_branch
      %16 = sbr.rel (0) target = $region5
    $region4: #{tpu_custom_call.1} parent=1 // pred_region
      %18 = vsyncadd [#allocation3], 0
      %s20 = sshll.u32 %s0, 4
      %s21 = int_to_ptr.hbm [resolvable:$true] %s20
      %s22 = sshll.u32 [#allocation2], 4
      %s23 = int_to_ptr.vmem [resolvable:$true] %s22
      %25 = dma.hbm_to_vmem [thread:$0]  %s21, 896, %s23, [#allocation3]
    $region5: #{tpu_custom_call.1} parent=1 // pred_fallthru
      _
    // Predicated region
    $region6: #{tpu_custom_call.1} parent=1 // pred_check
      _
    $region7: #{tpu_custom_call.1} parent=1 // pred_check_branch
      %27 = sbr.rel (0) target = $region9
    $region8: #{tpu_custom_call.1} parent=1 // pred_region
      %29 = vsyncadd [#allocation6], 0
      %s30 = sshll.u32 %s1, 4
      %s31 = int_to_ptr.hbm [resolvable:$true] %s30
      %s32 = sshll.u32 [#allocation5], 4
      %s33 = int_to_ptr.vmem [resolvable:$true] %s32
      %38 = dma.hbm_to_vmem [thread:$0]  %s31, 6272, %s33, [#allocation6], 64, 64, 4
    $region9: #{tpu_custom_call.1} parent=1 // pred_fallthru
      _
    // Predicated region
    $region10: #{tpu_custom_call.1} parent=1 // pred_check
      _
    $region11: #{tpu_custom_call.1} parent=1 // pred_check_branch
      %40 = sbr.rel (0) target = $region13
    $region12: #{tpu_custom_call.1} parent=1 // pred_region
      _
    $region13: #{tpu_custom_call.1} parent=1 // pred_fallthru
      _
    // Predicated region
    $region14: #{tpu_custom_call.1} parent=1 // pred_check
      _
    $region15: #{tpu_custom_call.1} parent=1 // pred_check_branch
      %42 = sbr.rel (0) target = $region17
    $region16: #{tpu_custom_call.1} parent=1 // pred_region
      _
    $region17: #{tpu_custom_call.1} parent=1 // pred_fallthru
      _
    // Predicated region
    $region18: #{tpu_custom_call.1} parent=1 // pred_check
      _
    $region19: #{tpu_custom_call.1} parent=1 // pred_check_branch
      %44 = sbr.rel (0) target = $region21
    $region20: #{tpu_custom_call.1} parent=1 // pred_region
      _
    $region21: #{tpu_custom_call.1} parent=1 // pred_fallthru
      _
    // Predicated region
    $region22: #{tpu_custom_call.1} parent=1 // pred_check
      _
    $region23: #{tpu_custom_call.1} parent=1 // pred_check_branch
      %46 = sbr.rel (0) target = $region25
    $region24: #{tpu_custom_call.1} parent=1 // pred_region
      _
    $region25: #{tpu_custom_call.1} parent=1 // pred_fallthru
      _
    // Predicated region
    $region26: #{tpu_custom_call.1} parent=1 // pred_check
      _
    $region27: #{tpu_custom_call.1} parent=1 // pred_check_branch
      %48 = sbr.rel (0) target = $region29
    $region28: #{tpu_custom_call.1} parent=1 // pred_region
      _
    $region29: #{tpu_custom_call.1} parent=1 // pred_fallthru
      _
    // Predicated region
    $region30: #{tpu_custom_call.1} parent=1 // pred_check
      _
    $region31: #{tpu_custom_call.1} parent=1 // pred_check_branch
      %50 = sbr.rel (0) target = $region33
    $region32: #{tpu_custom_call.1} parent=1 // pred_region
      %52 = dma.done [#allocation3], 896
    $region33: #{tpu_custom_call.1} parent=1 // pred_fallthru
      _
    // Predicated region
    $region34: #{tpu_custom_call.1} parent=1 // pred_check
      _
    $region35: #{tpu_custom_call.1} parent=1 // pred_check_branch
      %54 = sbr.rel (0) target = $region37
    $region36: #{tpu_custom_call.1} parent=1 // pred_region
      %56 = dma.done [#allocation6], 6272
    $region37: #{tpu_custom_call.1} parent=1 // pred_fallthru
      _
    %v58 = vld [vmem:[#allocation2] sm:$0xff]
    %v59 = vld [vmem:[#allocation2 + $0x8] sm:$0xff]
    %v60 = vld [vmem:[#allocation2 + $0x10] sm:$0xff]
    %v61 = vld [vmem:[#allocation2 + $0x18] sm:$0xff]
    %v62 = vld [vmem:[#allocation2 + $0x20] sm:$0xff]
    %v63 = vld [vmem:[#allocation2 + $0x28] sm:$0xff]
    %v64 = vld [vmem:[#allocation2 + $0x30] sm:$0xff]
    %v65 = vpack.c.bf16 %v58, %v58
    %v66 = vpack.c.bf16 %v59, %v59
    %v67 = vpack.c.bf16 %v60, %v60
    %v68 = vpack.c.bf16 %v61, %v61
    %v69 = vpack.c.bf16 %v62, %v62
    %v70 = vpack.c.bf16 %v63, %v63
    %v71 = vpack.c.bf16 %v64, %v64
    %v72 = vld [vmem:[#allocation5] sm:$0xf]
    %v73 = vld [vmem:[#allocation5 + $0x4] sm:$0xf]
    %v74 = vld [vmem:[#allocation5 + $0x8] sm:$0xf]
    %v75 = vld [vmem:[#allocation5 + $0xc] sm:$0xf]
    %v76 = vld [vmem:[#allocation5 + $0x10] sm:$0xf]
    %v77 = vld [vmem:[#allocation5 + $0x14] sm:$0xf]
    %v78 = vld [vmem:[#allocation5 + $0x18] sm:$0xf]
    %v79 = vld [vmem:[#allocation5 + $0x1c] sm:$0xf]
    %v80 = vld [vmem:[#allocation5 + $0x20] sm:$0xf]
    %v81 = vld [vmem:[#allocation5 + $0x24] sm:$0xf]
    %v82 = vld [vmem:[#allocation5 + $0x28] sm:$0xf]
    %v83 = vld [vmem:[#allocation5 + $0x2c] sm:$0xf]
    %v84 = vld [vmem:[#allocation5 + $0x30] sm:$0xf]
    %v85 = vld [vmem:[#allocation5 + $0x34] sm:$0xf]
    %v86 = vld [vmem:[#allocation5 + $0x38] sm:$0xf]
    %v87 = vld [vmem:[#allocation5 + $0x3c] sm:$0xf]
    %v88 = vld [vmem:[#allocation5 + $0x40] sm:$0xf]
    %v89 = vld [vmem:[#allocation5 + $0x44] sm:$0xf]
    %v90 = vld [vmem:[#allocation5 + $0x48] sm:$0xf]
    %v91 = vld [vmem:[#allocation5 + $0x4c] sm:$0xf]
    %v92 = vld [vmem:[#allocation5 + $0x50] sm:$0xf]
    %v93 = vld [vmem:[#allocation5 + $0x54] sm:$0xf]
    %v94 = vld [vmem:[#allocation5 + $0x58] sm:$0xf]
    %v95 = vld [vmem:[#allocation5 + $0x5c] sm:$0xf]
    %v96 = vld [vmem:[#allocation5 + $0x60] sm:$0xf]
    %v97 = vld [vmem:[#allocation5 + $0x64] sm:$0xf]
    %v98 = vld [vmem:[#allocation5 + $0x68] sm:$0xf]
    %v99 = vld [vmem:[#allocation5 + $0x6c] sm:$0xf]
    %v100 = vld [vmem:[#allocation5 + $0x70] sm:$0xf]
    %v101 = vld [vmem:[#allocation5 + $0x74] sm:$0xf]
    %v102 = vld [vmem:[#allocation5 + $0x78] sm:$0xf]
    %v103 = vld [vmem:[#allocation5 + $0x7c] sm:$0xf]
    %v104 = vld [vmem:[#allocation5 + $0x80] sm:$0xf]
    %v105 = vld [vmem:[#allocation5 + $0x84] sm:$0xf]
    %v106 = vld [vmem:[#allocation5 + $0x88] sm:$0xf]
    %v107 = vld [vmem:[#allocation5 + $0x8c] sm:$0xf]
    %v108 = vld [vmem:[#allocation5 + $0x90] sm:$0xf]
    %v109 = vld [vmem:[#allocation5 + $0x94] sm:$0xf]
    %v110 = vld [vmem:[#allocation5 + $0x98] sm:$0xf]
    %v111 = vld [vmem:[#allocation5 + $0x9c] sm:$0xf]
    %v112 = vld [vmem:[#allocation5 + $0xa0] sm:$0xf]
    %v113 = vld [vmem:[#allocation5 + $0xa4] sm:$0xf]
    %v114 = vld [vmem:[#allocation5 + $0xa8] sm:$0xf]
    %v115 = vld [vmem:[#allocation5 + $0xac] sm:$0xf]
    %v116 = vld [vmem:[#allocation5 + $0xb0] sm:$0xf]
    %v117 = vld [vmem:[#allocation5 + $0xb4] sm:$0xf]
    %v118 = vld [vmem:[#allocation5 + $0xb8] sm:$0xf]
    %v119 = vld [vmem:[#allocation5 + $0xbc] sm:$0xf]
    %v120 = vld [vmem:[#allocation5 + $0xc0] sm:$0xf]
    %v121 = vld [vmem:[#allocation5 + $0xc4] sm:$0xf]
    %v122 = vld [vmem:[#allocation5 + $0xc8] sm:$0xf]
    %v123 = vld [vmem:[#allocation5 + $0xcc] sm:$0xf]
    %v124 = vld [vmem:[#allocation5 + $0xd0] sm:$0xf]
    %v125 = vld [vmem:[#allocation5 + $0xd4] sm:$0xf]
    %v126 = vld [vmem:[#allocation5 + $0xd8] sm:$0xf]
    %v127 = vld [vmem:[#allocation5 + $0xdc] sm:$0xf]
    %v128 = vld [vmem:[#allocation5 + $0xe0] sm:$0xf]
    %v129 = vld [vmem:[#allocation5 + $0xe4] sm:$0xf]
    %v130 = vld [vmem:[#allocation5 + $0xe8] sm:$0xf]
    %v131 = vld [vmem:[#allocation5 + $0xec] sm:$0xf]
    %v132 = vld [vmem:[#allocation5 + $0xf0] sm:$0xf]
    %v133 = vld [vmem:[#allocation5 + $0xf4] sm:$0xf]
    %v134 = vld [vmem:[#allocation5 + $0xf8] sm:$0xf]
    %v135 = vld [vmem:[#allocation5 + $0xfc] sm:$0xf]
    %v136 = vld [vmem:[#allocation5 + $0x100] sm:$0xf]
    %v137 = vld [vmem:[#allocation5 + $0x104] sm:$0xf]
    %v138 = vld [vmem:[#allocation5 + $0x108] sm:$0xf]
    %v139 = vld [vmem:[#allocation5 + $0x10c] sm:$0xf]
    %v140 = vld [vmem:[#allocation5 + $0x110] sm:$0xf]
    %v141 = vld [vmem:[#allocation5 + $0x114] sm:$0xf]
    %v142 = vld [vmem:[#allocation5 + $0x118] sm:$0xf]
    %v143 = vld [vmem:[#allocation5 + $0x11c] sm:$0xf]
    %v144 = vld [vmem:[#allocation5 + $0x120] sm:$0xf]
    %v145 = vld [vmem:[#allocation5 + $0x124] sm:$0xf]
    %v146 = vld [vmem:[#allocation5 + $0x128] sm:$0xf]
    %v147 = vld [vmem:[#allocation5 + $0x12c] sm:$0xf]
    %v148 = vld [vmem:[#allocation5 + $0x130] sm:$0xf]
    %v149 = vld [vmem:[#allocation5 + $0x134] sm:$0xf]
    %v150 = vld [vmem:[#allocation5 + $0x138] sm:$0xf]
    %v151 = vld [vmem:[#allocation5 + $0x13c] sm:$0xf]
    %v152 = vld [vmem:[#allocation5 + $0x140] sm:$0xf]
    %v153 = vld [vmem:[#allocation5 + $0x144] sm:$0xf]
    %v154 = vld [vmem:[#allocation5 + $0x148] sm:$0xf]
    %v155 = vld [vmem:[#allocation5 + $0x14c] sm:$0xf]
    %v156 = vld [vmem:[#allocation5 + $0x150] sm:$0xf]
    %v157 = vld [vmem:[#allocation5 + $0x154] sm:$0xf]
    %v158 = vld [vmem:[#allocation5 + $0x158] sm:$0xf]
    %v159 = vld [vmem:[#allocation5 + $0x15c] sm:$0xf]
    %v160 = vld [vmem:[#allocation5 + $0x160] sm:$0xf]
    %v161 = vld [vmem:[#allocation5 + $0x164] sm:$0xf]
    %v162 = vld [vmem:[#allocation5 + $0x168] sm:$0xf]
    %v163 = vld [vmem:[#allocation5 + $0x16c] sm:$0xf]
    %v164 = vld [vmem:[#allocation5 + $0x170] sm:$0xf]
    %v165 = vld [vmem:[#allocation5 + $0x174] sm:$0xf]
    %v166 = vld [vmem:[#allocation5 + $0x178] sm:$0xf]
    %v167 = vld [vmem:[#allocation5 + $0x17c] sm:$0xf]
    %v168 = vld [vmem:[#allocation5 + $0x180] sm:$0xf]
    %v169 = vld [vmem:[#allocation5 + $0x184] sm:$0xf]
    %v170 = vld [vmem:[%s2] sm:$0x1]
    %v172 = vperm.slane %v170, 0
    %v272 = vunpack.c.l.b16 %v72
    %v273 = vunpack.c.l.b16 %v73
    %v274 = vunpack.c.l.b16 %v74
    %v275 = vunpack.c.l.b16 %v75
    %v276 = vunpack.c.l.b16 %v76
    %v277 = vunpack.c.l.b16 %v77
    %v278 = vunpack.c.l.b16 %v78
    %v279 = vunpack.c.l.b16 %v79
    %v280 = vunpack.c.l.b16 %v80
    %v281 = vunpack.c.l.b16 %v81
    %v282 = vunpack.c.l.b16 %v82
    %v283 = vunpack.c.l.b16 %v83
    %v284 = vunpack.c.l.b16 %v84
    %v285 = vunpack.c.l.b16 %v85
    %v286 = vunpack.c.l.b16 %v86
    %v287 = vunpack.c.l.b16 %v87
    %v288 = vunpack.c.l.b16 %v88
    %v289 = vunpack.c.l.b16 %v89
    %v290 = vunpack.c.l.b16 %v90
    %v291 = vunpack.c.l.b16 %v91
    %v292 = vunpack.c.l.b16 %v92
    %v293 = vunpack.c.l.b16 %v93
    %v294 = vunpack.c.l.b16 %v94
    %v295 = vunpack.c.l.b16 %v95
    %v296 = vunpack.c.l.b16 %v96
    %v297 = vunpack.c.l.b16 %v97
    %v298 = vunpack.c.l.b16 %v98
    %v299 = vunpack.c.l.b16 %v99
    %v300 = vunpack.c.l.b16 %v100
    %v301 = vunpack.c.l.b16 %v101
    %v302 = vunpack.c.l.b16 %v102
    %v303 = vunpack.c.l.b16 %v103
    %v304 = vunpack.c.l.b16 %v104
    %v305 = vunpack.c.l.b16 %v105
    %v306 = vunpack.c.l.b16 %v106
    %v307 = vunpack.c.l.b16 %v107
    %v308 = vunpack.c.l.b16 %v108
    %v309 = vunpack.c.l.b16 %v109
    %v310 = vunpack.c.l.b16 %v110
    %v311 = vunpack.c.l.b16 %v111
    %v312 = vunpack.c.l.b16 %v112
    %v313 = vunpack.c.l.b16 %v113
    %v314 = vunpack.c.l.b16 %v114
    %v315 = vunpack.c.l.b16 %v115
    %v316 = vunpack.c.l.b16 %v116
    %v317 = vunpack.c.l.b16 %v117
    %v318 = vunpack.c.l.b16 %v118
    %v319 = vunpack.c.l.b16 %v119
    %v320 = vunpack.c.l.b16 %v120
    %v321 = vunpack.c.l.b16 %v121
    %v322 = vunpack.c.l.b16 %v122
    %v323 = vunpack.c.l.b16 %v123
    %v324 = vunpack.c.l.b16 %v124
    %v325 = vunpack.c.l.b16 %v125
    %v326 = vunpack.c.l.b16 %v126
    %v327 = vunpack.c.l.b16 %v127
    %v328 = vunpack.c.l.b16 %v128
    %v329 = vunpack.c.l.b16 %v129
    %v330 = vunpack.c.l.b16 %v130
    %v331 = vunpack.c.l.b16 %v131
    %v332 = vunpack.c.l.b16 %v132
    %v333 = vunpack.c.l.b16 %v133
    %v334 = vunpack.c.l.b16 %v134
    %v335 = vunpack.c.l.b16 %v135
    %v336 = vunpack.c.l.b16 %v136
    %v337 = vunpack.c.l.b16 %v137
    %v338 = vunpack.c.l.b16 %v138
    %v339 = vunpack.c.l.b16 %v139
    %v340 = vunpack.c.l.b16 %v140
    %v341 = vunpack.c.l.b16 %v141
    %v342 = vunpack.c.l.b16 %v142
    %v343 = vunpack.c.l.b16 %v143
    %v344 = vunpack.c.l.b16 %v144
    %v345 = vunpack.c.l.b16 %v145
    %v346 = vunpack.c.l.b16 %v146
    %v347 = vunpack.c.l.b16 %v147
    %v348 = vunpack.c.l.b16 %v148
    %v349 = vunpack.c.l.b16 %v149
    %v350 = vunpack.c.l.b16 %v150
    %v351 = vunpack.c.l.b16 %v151
    %v352 = vunpack.c.l.b16 %v152
    %v353 = vunpack.c.l.b16 %v153
    %v354 = vunpack.c.l.b16 %v154
    %v355 = vunpack.c.l.b16 %v155
    %v356 = vunpack.c.l.b16 %v156
    %v357 = vunpack.c.l.b16 %v157
    %v358 = vunpack.c.l.b16 %v158
    %v359 = vunpack.c.l.b16 %v159
    %v360 = vunpack.c.l.b16 %v160
    %v361 = vunpack.c.l.b16 %v161
    %v362 = vunpack.c.l.b16 %v162
    %v363 = vunpack.c.l.b16 %v163
    %v364 = vunpack.c.l.b16 %v164
    %v365 = vunpack.c.l.b16 %v165
    %v366 = vunpack.c.l.b16 %v166
    %v367 = vunpack.c.l.b16 %v167
    %v368 = vunpack.c.l.b16 %v168
    %v369 = vunpack.c.l.b16 %v169
    %v370 = vpack.c.b16 %v273, %v272
    %v371 = vpack.c.b16 %v275, %v274
    %v372 = vpack.c.b16 %v277, %v276
    %v373 = vpack.c.b16 %v279, %v278
    %v374 = vpack.c.b16 %v281, %v280
    %v375 = vpack.c.b16 %v283, %v282
    %v376 = vpack.c.b16 %v285, %v284
    %v377 = vpack.c.b16 %v287, %v286
    %v378 = vpack.c.b16 %v289, %v288
    %v379 = vpack.c.b16 %v291, %v290
    %v380 = vpack.c.b16 %v293, %v292
    %v381 = vpack.c.b16 %v295, %v294
    %v382 = vpack.c.b16 %v297, %v296
    %v383 = vpack.c.b16 %v299, %v298
    %v384 = vpack.c.b16 %v301, %v300
    %v385 = vpack.c.b16 %v303, %v302
    %v386 = vpack.c.b16 %v305, %v304
    %v387 = vpack.c.b16 %v307, %v306
    %v388 = vpack.c.b16 %v309, %v308
    %v389 = vpack.c.b16 %v311, %v310
    %v390 = vpack.c.b16 %v313, %v312
    %v391 = vpack.c.b16 %v315, %v314
    %v392 = vpack.c.b16 %v317, %v316
    %v393 = vpack.c.b16 %v319, %v318
    %v394 = vpack.c.b16 %v321, %v320
    %v395 = vpack.c.b16 %v323, %v322
    %v396 = vpack.c.b16 %v325, %v324
    %v397 = vpack.c.b16 %v327, %v326
    %v398 = vpack.c.b16 %v329, %v328
    %v399 = vpack.c.b16 %v331, %v330
    %v400 = vpack.c.b16 %v333, %v332
    %v401 = vpack.c.b16 %v335, %v334
    %v402 = vpack.c.b16 %v337, %v336
    %v403 = vpack.c.b16 %v339, %v338
    %v404 = vpack.c.b16 %v341, %v340
    %v405 = vpack.c.b16 %v343, %v342
    %v406 = vpack.c.b16 %v345, %v344
    %v407 = vpack.c.b16 %v347, %v346
    %v408 = vpack.c.b16 %v349, %v348
    %v409 = vpack.c.b16 %v351, %v350
    %v410 = vpack.c.b16 %v353, %v352
    %v411 = vpack.c.b16 %v355, %v354
    %v412 = vpack.c.b16 %v357, %v356
    %v413 = vpack.c.b16 %v359, %v358
    %v414 = vpack.c.b16 %v361, %v360
    %v415 = vpack.c.b16 %v363, %v362
    %v416 = vpack.c.b16 %v365, %v364
    %v417 = vpack.c.b16 %v367, %v366
    %v418 = vpack.c.b16 %v369, %v368
    %vm468 = vcmask 130048
    %v470 = vsel %vm468, %v71, 0
    %472 = vmatpush.bf16.msra.mxu0 %v377
    %473 = vmatpush.bf16.msra.mxu0 %v376
    %474 = vmatpush.bf16.msra.mxu0 %v375
    %475 = vmatpush.bf16.msra.mxu0 %v374
    %476 = vmatpush.bf16.msra.mxu0 %v373
    %477 = vmatpush.bf16.msra.mxu0 %v372
    %478 = vmatpush.bf16.msra.mxu0 %v371
    %479 = vmatpush.bf16.msra.mxu0 %v370
    %480 = vmatmul.bf16.gmra.mxu0 %v65
    %v481 = vpop.f32.mrf.mxu0
    %v482 = vadd.f32 %v172, %v481
    %v483 = vpop.f32.mrf.mxu0
    %484 = vdwg.mxu0
    %485 = vmatpush.bf16.msra.mxu0 %v385
    %486 = vmatpush.bf16.msra.mxu0 %v384
    %487 = vmatpush.bf16.msra.mxu0 %v383
    %488 = vmatpush.bf16.msra.mxu0 %v382
    %489 = vmatpush.bf16.msra.mxu0 %v381
    %490 = vmatpush.bf16.msra.mxu0 %v380
    %491 = vmatpush.bf16.msra.mxu0 %v379
    %492 = vmatpush.bf16.msra.mxu0 %v378
    %493 = vmatmul.bf16.gmra.mxu0 %v66
    %v494 = vpop.f32.mrf.mxu0
    %v495 = vadd.f32 %v482, %v494
    %v496 = vpop.f32.mrf.mxu0
    %497 = vdwg.mxu0
    %498 = vmatpush.bf16.msra.mxu0 %v393
    %499 = vmatpush.bf16.msra.mxu0 %v392
    %500 = vmatpush.bf16.msra.mxu0 %v391
    %501 = vmatpush.bf16.msra.mxu0 %v390
    %502 = vmatpush.bf16.msra.mxu0 %v389
    %503 = vmatpush.bf16.msra.mxu0 %v388
    %504 = vmatpush.bf16.msra.mxu0 %v387
    %505 = vmatpush.bf16.msra.mxu0 %v386
    %506 = vmatmul.bf16.gmra.mxu0 %v67
    %v507 = vpop.f32.mrf.mxu0
    %v508 = vadd.f32 %v495, %v507
    %v509 = vpop.f32.mrf.mxu0
    %510 = vdwg.mxu0
    %511 = vmatpush.bf16.msra.mxu0 %v401
    %512 = vmatpush.bf16.msra.mxu0 %v400
    %513 = vmatpush.bf16.msra.mxu0 %v399
    %514 = vmatpush.bf16.msra.mxu0 %v398
    %515 = vmatpush.bf16.msra.mxu0 %v397
    %516 = vmatpush.bf16.msra.mxu0 %v396
    %517 = vmatpush.bf16.msra.mxu0 %v395
    %518 = vmatpush.bf16.msra.mxu0 %v394
    %519 = vmatmul.bf16.gmra.mxu0 %v68
    %v520 = vpop.f32.mrf.mxu0
    %v521 = vadd.f32 %v508, %v520
    %v522 = vpop.f32.mrf.mxu0
    %523 = vdwg.mxu0
    %524 = vmatpush.bf16.msra.mxu0 %v409
    %525 = vmatpush.bf16.msra.mxu0 %v408
    %526 = vmatpush.bf16.msra.mxu0 %v407
    %527 = vmatpush.bf16.msra.mxu0 %v406
    %528 = vmatpush.bf16.msra.mxu0 %v405
    %529 = vmatpush.bf16.msra.mxu0 %v404
    %530 = vmatpush.bf16.msra.mxu0 %v403
    %531 = vmatpush.bf16.msra.mxu0 %v402
    %532 = vmatmul.bf16.gmra.mxu0 %v69
    %v533 = vpop.f32.mrf.mxu0
    %v534 = vadd.f32 %v521, %v533
    %v535 = vpop.f32.mrf.mxu0
    %536 = vdwg.mxu0
    %537 = vmatpush.bf16.msra.mxu0 %v417
    %538 = vmatpush.bf16.msra.mxu0 %v416
    %539 = vmatpush.bf16.msra.mxu0 %v415
    %540 = vmatpush.bf16.msra.mxu0 %v414
    %541 = vmatpush.bf16.msra.mxu0 %v413
    %542 = vmatpush.bf16.msra.mxu0 %v412
    %543 = vmatpush.bf16.msra.mxu0 %v411
    %544 = vmatpush.bf16.msra.mxu0 %v410
    %545 = vmatmul.bf16.gmra.mxu0 %v70
    %v546 = vpop.f32.mrf.mxu0
    %v547 = vadd.f32 %v534, %v546
    %v548 = vpop.f32.mrf.mxu0
    %549 = vdwg.mxu0
    %550 = vmatpush.bf16.msra.mxu0 0
    %551 = vmatpush.bf16.msra.mxu0 0
    %552 = vmatpush.bf16.msra.mxu0 0
    %553 = vmatpush.bf16.msra.mxu0 0
    %554 = vmatpush.bf16.msra.mxu0 0
    %555 = vmatpush.bf16.msra.mxu0 0
    %556 = vmatpush.bf16.msra.mxu0 0
    %557 = vmatpush.bf16.msra.mxu0 %v418
    %558 = vmatmul.bf16.gmra.mxu0 %v470
    %v559 = vpop.f32.mrf.mxu0
    %v560 = vadd.f32 %v547, %v559
    %v561 = vpop.f32.mrf.mxu0
    %562 = vdwg.mxu0
    %v563 = vmax.f32 %v560, 0.0
    %v564 = vpack.c.bf16 %v563, %v563
    %v565 = vld [vmem:[%s3] sm:$0xff]
    %v566 = vld [vmem:[%s3 + $0x8] sm:$0xff]
    %v567 = vld [vmem:[%s3 + $0x10] sm:$0xff]
    %v568 = vld [vmem:[%s3 + $0x18] sm:$0xff]
    %v569 = vld [vmem:[%s3 + $0x20] sm:$0xff]
    %v570 = vld [vmem:[%s3 + $0x28] sm:$0xff]
    %v571 = vld [vmem:[%s3 + $0x30] sm:$0xff]
    %v572 = vld [vmem:[%s3 + $0x38] sm:$0xff]
    %v573 = vld [vmem:[%s3 + $0x40] sm:$0xff]
    %v574 = vld [vmem:[%s3 + $0x48] sm:$0xff]
    %v575 = vld [vmem:[%s3 + $0x50] sm:$0xff]
    %v576 = vld [vmem:[%s3 + $0x58] sm:$0xff]
    %v577 = vld [vmem:[%s3 + $0x60] sm:$0xff]
    %v578 = vld [vmem:[%s3 + $0x68] sm:$0xff]
    %v579 = vld [vmem:[%s3 + $0x70] sm:$0xff]
    %v580 = vld [vmem:[%s3 + $0x78] sm:$0xff]
    %v581 = vld [vmem:[%s4] sm:$0x3]
    %v583 = vperm.slane %v581, 0
    %v584 = vperm.slane %v581, 1
    %v603 = vunpack.c.l.b16 %v565
    %v604 = vunpack.c.h.b16 %v565
    %v605 = vunpack.c.l.b16 %v566
    %v606 = vunpack.c.h.b16 %v566
    %v607 = vunpack.c.l.b16 %v567
    %v608 = vunpack.c.h.b16 %v567
    %v609 = vunpack.c.l.b16 %v568
    %v610 = vunpack.c.h.b16 %v568
    %v611 = vunpack.c.l.b16 %v569
    %v612 = vunpack.c.h.b16 %v569
    %v613 = vunpack.c.l.b16 %v570
    %v614 = vunpack.c.h.b16 %v570
    %v615 = vunpack.c.l.b16 %v571
    %v616 = vunpack.c.h.b16 %v571
    %v617 = vunpack.c.l.b16 %v572
    %v618 = vunpack.c.h.b16 %v572
    %v619 = vunpack.c.l.b16 %v573
    %v620 = vunpack.c.h.b16 %v573
    %v621 = vunpack.c.l.b16 %v574
    %v622 = vunpack.c.h.b16 %v574
    %v623 = vunpack.c.l.b16 %v575
    %v624 = vunpack.c.h.b16 %v575
    %v625 = vunpack.c.l.b16 %v576
    %v626 = vunpack.c.h.b16 %v576
    %v627 = vunpack.c.l.b16 %v577
    %v628 = vunpack.c.h.b16 %v577
    %v629 = vunpack.c.l.b16 %v578
    %v630 = vunpack.c.h.b16 %v578
    %v631 = vunpack.c.l.b16 %v579
    %v632 = vunpack.c.h.b16 %v579
    %v633 = vunpack.c.l.b16 %v580
    %v634 = vunpack.c.h.b16 %v580
    %v635 = vpack.c.b16 %v605, %v603
    %v636 = vpack.c.b16 %v606, %v604
    %v637 = vpack.c.b16 %v609, %v607
    %v638 = vpack.c.b16 %v610, %v608
    %v639 = vpack.c.b16 %v613, %v611
    %v640 = vpack.c.b16 %v614, %v612
    %v641 = vpack.c.b16 %v617, %v615
    %v642 = vpack.c.b16 %v618, %v616
    %v643 = vpack.c.b16 %v621, %v619
    %v644 = vpack.c.b16 %v622, %v620
    %v645 = vpack.c.b16 %v625, %v623
    %v646 = vpack.c.b16 %v626, %v624
    %v647 = vpack.c.b16 %v629, %v627
    %v648 = vpack.c.b16 %v630, %v628
    %v649 = vpack.c.b16 %v633, %v631
    %v650 = vpack.c.b16 %v634, %v632
    %667 = vmatpush.bf16.msra.mxu0 %v649
    %668 = vmatpush.bf16.msra.mxu0 %v647
    %669 = vmatpush.bf16.msra.mxu0 %v645
    %670 = vmatpush.bf16.msra.mxu0 %v643
    %671 = vmatpush.bf16.msra.mxu0 %v641
    %672 = vmatpush.bf16.msra.mxu0 %v639
    %673 = vmatpush.bf16.msra.mxu0 %v637
    %674 = vmatpush.bf16.msra.mxu0 %v635
    %675 = vmatmul.bf16.gmra.mxu0 %v564
    %v676 = vpop.f32.mrf.mxu0
    %v677 = vadd.f32 %v583, %v676
    %v678 = vpop.f32.mrf.mxu0
    %679 = vdwg.mxu0
    %680 = vmatpush.bf16.msra.mxu0 %v650
    %681 = vmatpush.bf16.msra.mxu0 %v648
    %682 = vmatpush.bf16.msra.mxu0 %v646
    %683 = vmatpush.bf16.msra.mxu0 %v644
    %684 = vmatpush.bf16.msra.mxu0 %v642
    %685 = vmatpush.bf16.msra.mxu0 %v640
    %686 = vmatpush.bf16.msra.mxu0 %v638
    %687 = vmatpush.bf16.msra.mxu0 %v636
    %688 = vmatmul.bf16.gmra.mxu0 %v564
    %v689 = vpop.f32.mrf.mxu0
    %v690 = vadd.f32 %v584, %v689
    %v691 = vpop.f32.mrf.mxu0
    %692 = vdwg.mxu0
    %v693 = vmax.f32 %v677, 0.0
    %v694 = vmax.f32 %v690, 0.0
    %v695 = vpack.c.bf16 %v693, %v693
    %v696 = vpack.c.bf16 %v694, %v694
    %v697 = vld [vmem:[%s5] sm:$0xf]
    %v698 = vld [vmem:[%s5 + $0x4] sm:$0xf]
    %v699 = vld [vmem:[%s5 + $0x8] sm:$0xf]
    %v700 = vld [vmem:[%s5 + $0xc] sm:$0xf]
    %v701 = vld [vmem:[%s5 + $0x10] sm:$0xf]
    %v702 = vld [vmem:[%s5 + $0x14] sm:$0xf]
    %v703 = vld [vmem:[%s5 + $0x18] sm:$0xf]
    %v704 = vld [vmem:[%s5 + $0x1c] sm:$0xf]
    %v705 = vld [vmem:[%s5 + $0x20] sm:$0xf]
    %v706 = vld [vmem:[%s5 + $0x24] sm:$0xf]
    %v707 = vld [vmem:[%s5 + $0x28] sm:$0xf]
    %v708 = vld [vmem:[%s5 + $0x2c] sm:$0xf]
    %v709 = vld [vmem:[%s5 + $0x30] sm:$0xf]
    %v710 = vld [vmem:[%s5 + $0x34] sm:$0xf]
    %v711 = vld [vmem:[%s5 + $0x38] sm:$0xf]
    %v712 = vld [vmem:[%s5 + $0x3c] sm:$0xf]
    %v713 = vld [vmem:[%s5 + $0x40] sm:$0xf]
    %v714 = vld [vmem:[%s5 + $0x44] sm:$0xf]
    %v715 = vld [vmem:[%s5 + $0x48] sm:$0xf]
    %v716 = vld [vmem:[%s5 + $0x4c] sm:$0xf]
    %v717 = vld [vmem:[%s5 + $0x50] sm:$0xf]
    %v718 = vld [vmem:[%s5 + $0x54] sm:$0xf]
    %v719 = vld [vmem:[%s5 + $0x58] sm:$0xf]
    %v720 = vld [vmem:[%s5 + $0x5c] sm:$0xf]
    %v721 = vld [vmem:[%s5 + $0x60] sm:$0xf]
    %v722 = vld [vmem:[%s5 + $0x64] sm:$0xf]
    %v723 = vld [vmem:[%s5 + $0x68] sm:$0xf]
    %v724 = vld [vmem:[%s5 + $0x6c] sm:$0xf]
    %v725 = vld [vmem:[%s5 + $0x70] sm:$0xf]
    %v726 = vld [vmem:[%s5 + $0x74] sm:$0xf]
    %v727 = vld [vmem:[%s5 + $0x78] sm:$0xf]
    %v728 = vld [vmem:[%s5 + $0x7c] sm:$0xf]
    %v729 = vld [vmem:[%s6] sm:$0x1]
    %v731 = vperm.slane %v729, 0
    %v765 = vunpack.c.l.b16 %v697
    %v766 = vunpack.c.l.b16 %v698
    %v767 = vunpack.c.l.b16 %v699
    %v768 = vunpack.c.l.b16 %v700
    %v769 = vunpack.c.l.b16 %v701
    %v770 = vunpack.c.l.b16 %v702
    %v771 = vunpack.c.l.b16 %v703
    %v772 = vunpack.c.l.b16 %v704
    %v773 = vunpack.c.l.b16 %v705
    %v774 = vunpack.c.l.b16 %v706
    %v775 = vunpack.c.l.b16 %v707
    %v776 = vunpack.c.l.b16 %v708
    %v777 = vunpack.c.l.b16 %v709
    %v778 = vunpack.c.l.b16 %v710
    %v779 = vunpack.c.l.b16 %v711
    %v780 = vunpack.c.l.b16 %v712
    %v781 = vunpack.c.l.b16 %v713
    %v782 = vunpack.c.l.b16 %v714
    %v783 = vunpack.c.l.b16 %v715
    %v784 = vunpack.c.l.b16 %v716
    %v785 = vunpack.c.l.b16 %v717
    %v786 = vunpack.c.l.b16 %v718
    %v787 = vunpack.c.l.b16 %v719
    %v788 = vunpack.c.l.b16 %v720
    %v789 = vunpack.c.l.b16 %v721
    %v790 = vunpack.c.l.b16 %v722
    %v791 = vunpack.c.l.b16 %v723
    %v792 = vunpack.c.l.b16 %v724
    %v793 = vunpack.c.l.b16 %v725
    %v794 = vunpack.c.l.b16 %v726
    %v795 = vunpack.c.l.b16 %v727
    %v796 = vunpack.c.l.b16 %v728
    %v797 = vpack.c.b16 %v766, %v765
    %v798 = vpack.c.b16 %v768, %v767
    %v799 = vpack.c.b16 %v770, %v769
    %v800 = vpack.c.b16 %v772, %v771
    %v801 = vpack.c.b16 %v774, %v773
    %v802 = vpack.c.b16 %v776, %v775
    %v803 = vpack.c.b16 %v778, %v777
    %v804 = vpack.c.b16 %v780, %v779
    %v805 = vpack.c.b16 %v782, %v781
    %v806 = vpack.c.b16 %v784, %v783
    %v807 = vpack.c.b16 %v786, %v785
    %v808 = vpack.c.b16 %v788, %v787
    %v809 = vpack.c.b16 %v790, %v789
    %v810 = vpack.c.b16 %v792, %v791
    %v811 = vpack.c.b16 %v794, %v793
    %v812 = vpack.c.b16 %v796, %v795
    %829 = vmatpush.bf16.msra.mxu0 %v804
    %830 = vmatpush.bf16.msra.mxu0 %v803
    %831 = vmatpush.bf16.msra.mxu0 %v802
    %832 = vmatpush.bf16.msra.mxu0 %v801
    %833 = vmatpush.bf16.msra.mxu0 %v800
    %834 = vmatpush.bf16.msra.mxu0 %v799
    %835 = vmatpush.bf16.msra.mxu0 %v798
    %836 = vmatpush.bf16.msra.mxu0 %v797
    %837 = vmatmul.bf16.gmra.mxu0 %v695
    %v838 = vpop.f32.mrf.mxu0
    %v839 = vadd.f32 %v731, %v838
    %v840 = vpop.f32.mrf.mxu0
    %841 = vdwg.mxu0
    %842 = vmatpush.bf16.msra.mxu0 %v812
    %843 = vmatpush.bf16.msra.mxu0 %v811
    %844 = vmatpush.bf16.msra.mxu0 %v810
    %845 = vmatpush.bf16.msra.mxu0 %v809
    %846 = vmatpush.bf16.msra.mxu0 %v808
    %847 = vmatpush.bf16.msra.mxu0 %v807
    %848 = vmatpush.bf16.msra.mxu0 %v806
    %849 = vmatpush.bf16.msra.mxu0 %v805
    %850 = vmatmul.bf16.gmra.mxu0 %v696
    %v851 = vpop.f32.mrf.mxu0
    %v852 = vadd.f32 %v839, %v851
    %v853 = vpop.f32.mrf.mxu0
    %854 = vdwg.mxu0
    %vm855 = vcmask 80896
    %856 = vst.msk [vmem:[#allocation7] sm:$0xff] %vm855, %v852
    // Predicated region
    $region38: #{tpu_custom_call.1} parent=1 // pred_check
      _
    $region39: #{tpu_custom_call.1} parent=1 // pred_check_branch
      %858 = sbr.rel (0) target = $region41
    $region40: #{tpu_custom_call.1} parent=1 // pred_region
      %860 = vsyncadd [#allocation4], 0
      %s862 = sshll.u32 [#allocation7], 4
      %s863 = int_to_ptr.vmem [resolvable:$true] %s862
      %s864 = sshll.u32 %s7, 4
      %s865 = int_to_ptr.hbm [resolvable:$true] %s864
      %867 = dma.vmem_to_hbm [thread:$0]  %s863, 128, %s865, [#allocation4]
    $region41: #{tpu_custom_call.1} parent=1 // pred_fallthru
      _
    // Predicated region
    $region42: #{tpu_custom_call.1} parent=1 // pred_check
      _
    $region43: #{tpu_custom_call.1} parent=1 // pred_check_branch
      %869 = sbr.rel (0) target = $region45
    $region44: #{tpu_custom_call.1} parent=1 // pred_region
      %871 = dma.done [#allocation4], 128
    $region45: #{tpu_custom_call.1} parent=1 // pred_fallthru
      _
    %872 = vsyncpa [#allocation3], 1
    %873 = vsyncpa [#allocation6], 1
    %874 = vsyncpa [#allocation4], 1

</llo_original>
